<compile_context>
chip_gen: v7x
topology: tpu7x:2x2x1
jax: 0.10.0
libtpu: 0.0.40
codegen_flags: <defaults>
</compile_context>

<pallas_src>
import functools

import jax
import jax.numpy as jnp
from jax import lax
from jax.experimental import pallas as pl
from jax.experimental.pallas import tpu as pltpu


def _round_up(x, m):
    return ((x + m - 1) // m) * m


def _vmem_capacity_bytes():
    """Best-effort per-core VMEM query; conservative 64 MiB (v7x) fallback."""
    try:
        info = pltpu.get_tpu_info()
        cap = int(getattr(info, "vmem_capacity_bytes", 0))
        if cap > 0:
            return cap
    except Exception:
        pass
    return 64 << 20


def ffwd_resident_kernel(x_ref, w1_ref, b1_ref, w2_ref, b2_ref, o_ref, acc_ref,
                         *, th, n_h):
    # x_ref:  [TM, C] bf16   w1_ref: [C, H] bf16   b1_ref: [1, H] f32
    # w2_ref: [H, C]  bf16   b2_ref: [1, C] f32    o_ref:  [TM, C]
    # acc_ref: [TM, C] f32 scratch.  Weights are VMEM-resident (Buffered(1)).
    x = x_ref[...]
    # Fold the second bias into the accumulator init (saves a [TM,C] VPU add).
    acc_ref[...] = jnp.broadcast_to(b2_ref[...], acc_ref.shape).astype(jnp.float32)

    def body(k, carry):
        off = pl.multiple_of(k * th, th)
        w1_k = w1_ref[:, pl.ds(off, th)]          # [C, TH] bf16
        b1_k = b1_ref[:, pl.ds(off, th)]          # [1, TH] f32
        w2_k = w2_ref[pl.ds(off, th), :]          # [TH, C] bf16
        h = jnp.dot(x, w1_k, preferred_element_type=jnp.float32) + b1_k
        h = jnp.maximum(h, 0.0)
        acc_ref[...] += jnp.dot(h.astype(w2_k.dtype), w2_k,
                                preferred_element_type=jnp.float32)
        return carry

    # Partial unroll keeps at most two [TM, TH] hidden temporaries live.
    lax.fori_loop(0, n_h, body, 0, unroll=min(2, max(n_h, 1)))

    # TODO(synk): nn.Dropout is identity in eval mode; training-mode dropout
    # would use pltpu.prng_seed + pltpu.stateful_bernoulli here.
    o_ref[...] = acc_ref[...].astype(o_ref.dtype)


def ffwd_stream_kernel(x_ref, w1_ref, b1_ref, w2_ref, b2_ref, o_ref, acc_ref):
    # grid = (token_tiles, hidden_chunks); hidden axis is a reduction.
    # x_ref: [TM, C] bf16  w1_ref: [C, TH] bf16  b1_ref: [1, TH] f32
    # w2_ref: [TH, C] bf16 b2_ref: [1, C] f32    acc_ref: [TM, C] f32
    k = pl.program_id(1)

    @pl.when(k == 0)
    def _():
        acc_ref[...] = jnp.broadcast_to(b2_ref[...], acc_ref.shape).astype(jnp.float32)

    h = jnp.dot(x_ref[...], w1_ref[...],
                preferred_element_type=jnp.float32) + b1_ref[...]
    h = jnp.maximum(h, 0.0)
    acc_ref[...] += jnp.dot(h.astype(w2_ref.dtype), w2_ref[...],
                            preferred_element_type=jnp.float32)

    @pl.when(k == pl.num_programs(1) - 1)
    def _():
        # TODO(synk): Dropout is identity in eval mode.
        o_ref[...] = acc_ref[...].astype(o_ref.dtype)


def feed_forward(x, w1, b1, w2, b2, *, tm=None, th=None):
    B, T, C = x.shape
    H = w1.shape[1]  # 4 * C
    M = B * T
    itemsize_out = jnp.dtype(x.dtype).itemsize

    # Generation-aware VMEM budget (~0.8x physical per-core VMEM).
    vmem_cap = _vmem_capacity_bytes()
    vmem_budget = int(0.8 * vmem_cap)

    # Token-tile size: big tiles amortize ~0.35us/step pipeline overhead.
    # v5e/v6e (128 MiB VMEM) -> 1024; v7x (64 MiB) -> 512.
    if tm is None:
        tm = 1024 if vmem_cap >= (100 << 20) else 512
    # Keep at least 2 grid steps so both v7x TensorCores get work; keep tiles
    # multiples of 8 sublanes and never exceed the padded token count.
    if M > 8:
        tm = min(tm, _round_up(pl.cdiv(M, 2), 8))
    tm = max(8, min(tm, _round_up(M, 8)))
    M_pad = _round_up(M, tm)
    m_tiles = M_pad // tm

    # Hidden-chunk size: largest 128-multiple dividing H (else whole H).
    if th is None or th % 128 != 0 or H % th != 0:
        th = next((t for t in (1024, 512, 256, 128) if H % t == 0), H)
    n_h = H // th

    # Resident-weight VMEM estimate (single-buffered bf16 weights, pipelined
    # x/out tiles, f32 accumulator, two unrolled [TM,TH] hidden temps).
    weights_bytes = 2 * C * H * 2 + (H + C) * 4
    tiles_bytes = 2 * tm * C * 2 + 2 * tm * C * itemsize_out
    acc_bytes = tm * C * 4
    hidden_tmp_bytes = 2 * tm * th * 6
    resident_total = weights_bytes + tiles_bytes + acc_bytes + hidden_tmp_bytes
    use_resident = resident_total <= vmem_budget

    # Flatten + pad tokens; bf16 matmul operands, f32 biases.
    x2d = x.reshape(M, C)
    if M_pad != M:
        x2d = jnp.pad(x2d, ((0, M_pad - M), (0, 0)))
    x_bf = x2d.astype(jnp.bfloat16)
    w1_bf = w1.astype(jnp.bfloat16)
    w2_bf = w2.astype(jnp.bfloat16)
    b1_f32 = b1.reshape(1, H).astype(jnp.float32)
    b2_f32 = b2.reshape(1, C).astype(jnp.float32)

    cost = pl.CostEstimate(
        flops=4 * M_pad * C * H,                 # two matmuls, 2*M*C*H each
        transcendentals=0,
        bytes_accessed=(x_bf.size * 2 + w1_bf.size * 2 + w2_bf.size * 2
                        + b1_f32.size * 4 + b2_f32.size * 4
                        + M_pad * C * itemsize_out),
    )
    out_shape = jax.ShapeDtypeStruct((M_pad, C), x.dtype)
    compiler_params_1d = pltpu.CompilerParams(
        dimension_semantics=("parallel",), vmem_limit_bytes=vmem_budget)
    compiler_params_2d = pltpu.CompilerParams(
        dimension_semantics=("parallel", "arbitrary"),
        vmem_limit_bytes=vmem_budget)

    def resident_call(single_buffer_weights):
        # Single-buffer the constant-index resident operands (halves their
        # VMEM footprint); fall back to default buffering if unsupported.
        wkw = (dict(pipeline_mode=pl.Buffered(1))
               if single_buffer_weights else {})
        return pl.pallas_call(
            functools.partial(ffwd_resident_kernel, th=th, n_h=n_h),
            out_shape=out_shape,
            grid_spec=pltpu.PrefetchScalarGridSpec(
                num_scalar_prefetch=0,
                grid=(m_tiles,),
                in_specs=[
                    pl.BlockSpec((tm, C), lambda i: (i, 0)),          # x tile
                    pl.BlockSpec((C, H), lambda i: (0, 0), **wkw),    # w1
                    pl.BlockSpec((1, H), lambda i: (0, 0), **wkw),    # b1
                    pl.BlockSpec((H, C), lambda i: (0, 0), **wkw),    # w2
                    pl.BlockSpec((1, C), lambda i: (0, 0), **wkw),    # b2
                ],
                out_specs=pl.BlockSpec((tm, C), lambda i: (i, 0)),
                scratch_shapes=[pltpu.VMEM((tm, C), jnp.float32)],
            ),
            compiler_params=compiler_params_1d,
            cost_estimate=cost,
        )(x_bf, w1_bf, b1_f32, w2_bf, b2_f32)

    def streaming_call():
        # Large-C fallback: stream [C,TH]/[TH,C] weight chunks over an inner
        # reduction grid axis; f32 accumulator stays resident across it.
        return pl.pallas_call(
            ffwd_stream_kernel,
            out_shape=out_shape,
            grid_spec=pltpu.PrefetchScalarGridSpec(
                num_scalar_prefetch=0,
                grid=(m_tiles, n_h),
                in_specs=[
                    pl.BlockSpec((tm, C), lambda i, k: (i, 0)),
                    pl.BlockSpec((C, th), lambda i, k: (0, k)),
                    pl.BlockSpec((1, th), lambda i, k: (0, k)),
                    pl.BlockSpec((th, C), lambda i, k: (k, 0)),
                    pl.BlockSpec((1, C), lambda i, k: (0, 0)),
                ],
                out_specs=pl.BlockSpec((tm, C), lambda i, k: (i, 0)),
                scratch_shapes=[pltpu.VMEM((tm, C), jnp.float32)],
            ),
            compiler_params=compiler_params_2d,
            cost_estimate=cost,
        )(x_bf, w1_bf, b1_f32, w2_bf, b2_f32)

    if use_resident:
        try:
            out2d = resident_call(single_buffer_weights=True)
        except Exception:
            # pipeline_mode=pl.Buffered(1) unsupported on this jax version.
            out2d = resident_call(single_buffer_weights=False)
    else:
        out2d = streaming_call()

    return out2d[:M].reshape(B, T, C)


def init_params(key, n_embd):
    """Deterministic init matching nn.Linear's U(-1/sqrt(fan_in), 1/sqrt(fan_in))."""
    k1, k2, k3, k4 = jax.random.split(key, 4)
    hid = 4 * n_embd
    bound1 = 1.0 / jnp.sqrt(n_embd)
    bound2 = 1.0 / jnp.sqrt(hid)
    # store weights as [in, out] (transpose of PyTorch's [out, in])
    w1 = jax.random.uniform(k1, (n_embd, hid), jnp.float32, -bound1, bound1)
    b1 = jax.random.uniform(k2, (1, hid), jnp.float32, -bound1, bound1)
    w2 = jax.random.uniform(k3, (hid, n_embd), jnp.float32, -bound2, bound2)
    b2 = jax.random.uniform(k4, (1, n_embd), jnp.float32, -bound2, bound2)
    return w1, b1, w2, b2


if __name__ == "__main__":
    key = jax.random.PRNGKey(0)
    kx, kp = jax.random.split(key)

    B, T, n_embd = 2, 8, 32          # small shapes consistent with the module
    x = jax.random.normal(kx, (B, T, n_embd), jnp.float32)
    w1, b1, w2, b2 = init_params(kp, n_embd)

    out = jax.block_until_ready(feed_forward(x, w1, b1, w2, b2))

    # reference check in plain JAX (f32). Kernel uses bf16 operands with f32
    # accumulation, so compare at bf16-level tolerance.
    ref = jnp.maximum(x.reshape(-1, n_embd) @ w1 + b1, 0.0) @ w2 + b2
    ref = ref.reshape(B, T, n_embd)
    assert out.shape == (B, T, n_embd)
    assert jnp.allclose(out, ref, atol=2e-2, rtol=2e-2), float(
        jnp.max(jnp.abs(out - ref)))

    print("KERNEL_OK")
</pallas_src>

<mosaic_0001>
module attributes {stable_mosaic.version = 11 : i64} {
  func.func @ffwd_resident_kernel(%arg0: i32, %arg1: memref<8x32xbf16, #tpu.memory_space<vmem>>, %arg2: memref<32x128xbf16, #tpu.memory_space<vmem>>, %arg3: memref<1x128xf32, #tpu.memory_space<vmem>>, %arg4: memref<128x32xbf16, #tpu.memory_space<vmem>>, %arg5: memref<1x32xf32, #tpu.memory_space<vmem>>, %arg6: memref<8x32xf32, #tpu.memory_space<vmem>>, %arg7: memref<8x32xf32, #tpu.memory_space<vmem>>) attributes {dimension_semantics = [#tpu.dimension_semantics<parallel>], iteration_bounds = array<i64: 2>, scalar_prefetch = 0 : i64, scratch_operands = 1 : i64, tpu.core_type = #tpu.core_type<tc>, window_params = [{transform_indices = @transform_0, window_bounds = array<i64: 8, 32>}, {pipeline_mode = #tpu.pipeline_mode<synchronous>, transform_indices = @transform_1, window_bounds = array<i64: 32, 128>}, {pipeline_mode = #tpu.pipeline_mode<synchronous>, transform_indices = @transform_2, window_bounds = array<i64: 1, 128>}, {pipeline_mode = #tpu.pipeline_mode<synchronous>, transform_indices = @transform_3, window_bounds = array<i64: 128, 32>}, {pipeline_mode = #tpu.pipeline_mode<synchronous>, transform_indices = @transform_4, window_bounds = array<i64: 1, 32>}, {transform_indices = @transform_5, window_bounds = array<i64: 8, 32>}]} {
    %c0 = arith.constant 0 : index
    %c0_0 = arith.constant 0 : index
    %0 = vector.load %arg1[%c0, %c0_0] : memref<8x32xbf16, #tpu.memory_space<vmem>>, vector<8x32xbf16>
    %c0_1 = arith.constant 0 : index
    %c0_2 = arith.constant 0 : index
    %1 = vector.load %arg5[%c0_1, %c0_2] : memref<1x32xf32, #tpu.memory_space<vmem>>, vector<1x32xf32>
    %2 = vector.shape_cast %1 : vector<1x32xf32> to vector<1x32xf32>
    %3 = vector.broadcast %2 : vector<1x32xf32> to vector<8x32xf32>
    %c0_3 = arith.constant 0 : index
    %c0_4 = arith.constant 0 : index
    %4 = vector.load %arg7[%c0_3, %c0_4] : memref<8x32xf32, #tpu.memory_space<vmem>>, vector<8x32xf32>
    tpu.vector_store %arg7[%c0_3, %c0_4], %3 {strides = array<i32>} : memref<8x32xf32, #tpu.memory_space<vmem>>, vector<8x32xf32>,
    %c0_i32 = arith.constant 0 : i32
    %c128_i32 = arith.constant 128 : i32
    %5 = arith.muli %c0_i32, %c128_i32 : i32
    %6 = tpu.assume_multiple %5, 128 : i32
    %c0_5 = arith.constant 0 : index
    %7 = arith.index_cast %6 : i32 to index
    %8 = vector.load %arg2[%c0_5, %7] : memref<32x128xbf16, #tpu.memory_space<vmem>>, vector<32x128xbf16>
    %c0_6 = arith.constant 0 : index
    %9 = arith.index_cast %6 : i32 to index
    %10 = vector.load %arg3[%c0_6, %9] : memref<1x128xf32, #tpu.memory_space<vmem>>, vector<1x128xf32>
    %11 = arith.index_cast %6 : i32 to index
    %c0_7 = arith.constant 0 : index
    %12 = vector.load %arg4[%11, %c0_7] : memref<128x32xbf16, #tpu.memory_space<vmem>>, vector<128x32xbf16>
    %cst = arith.constant dense<0.000000e+00> : vector<8x128xf32>
    %13 = tpu.matmul %0, %8, %cst {dimension_numbers = #tpu.dot_dimension_numbers<[1], [0], [0], [1], [0, 0, 1, 1], [], []>} : vector<8x32xbf16>, vector<32x128xbf16>, vector<8x128xf32> -> vector<8x128xf32>
    %14 = vector.broadcast %10 : vector<1x128xf32> to vector<8x128xf32>
    %15 = arith.addf %13, %14 : vector<8x128xf32>
    %cst_8 = arith.constant 0.000000e+00 : f32
    %16 = vector.broadcast %cst_8 : f32 to vector<8x128xf32>
    %17 = arith.maximumf %15, %16 : vector<8x128xf32>
    %c0_9 = arith.constant 0 : index
    %c0_10 = arith.constant 0 : index
    %18 = vector.load %arg7[%c0_9, %c0_10] : memref<8x32xf32, #tpu.memory_space<vmem>>, vector<8x32xf32>
    %19 = arith.truncf %17 : vector<8x128xf32> to vector<8x128xbf16>
    %cst_11 = arith.constant dense<0.000000e+00> : vector<8x32xf32>
    %20 = tpu.matmul %19, %12, %cst_11 {dimension_numbers = #tpu.dot_dimension_numbers<[1], [0], [0], [1], [0, 0, 1, 1], [], []>} : vector<8x128xbf16>, vector<128x32xbf16>, vector<8x32xf32> -> vector<8x32xf32>
    %21 = arith.addf %18, %20 : vector<8x32xf32>
    %c0_12 = arith.constant 0 : index
    %c0_13 = arith.constant 0 : index
    %22 = vector.load %arg7[%c0_12, %c0_13] : memref<8x32xf32, #tpu.memory_space<vmem>>, vector<8x32xf32>
    tpu.vector_store %arg7[%c0_12, %c0_13], %21 {strides = array<i32>} : memref<8x32xf32, #tpu.memory_space<vmem>>, vector<8x32xf32>,
    %c1_i32 = arith.constant 1 : i32
    %c0_14 = arith.constant 0 : index
    %c0_15 = arith.constant 0 : index
    %23 = vector.load %arg7[%c0_14, %c0_15] : memref<8x32xf32, #tpu.memory_space<vmem>>, vector<8x32xf32>
    %c0_16 = arith.constant 0 : index
    %c0_17 = arith.constant 0 : index
    %24 = vector.load %arg6[%c0_16, %c0_17] : memref<8x32xf32, #tpu.memory_space<vmem>>, vector<8x32xf32>
    tpu.vector_store %arg6[%c0_16, %c0_17], %23 {strides = array<i32>} : memref<8x32xf32, #tpu.memory_space<vmem>>, vector<8x32xf32>,
    return
  }
  func.func @transform_0(%arg0: i32) -> (i32, i32) {
    %c0_i32 = arith.constant 0 : i32
    %c0_i32_0 = arith.constant 0 : i32
    return %arg0, %c0_i32 : i32, i32
  }
  func.func @transform_1(%arg0: i32) -> (i32, i32) {
    %c0_i32 = arith.constant 0 : i32
    %c0_i32_0 = arith.constant 0 : i32
    %c0_i32_1 = arith.constant 0 : i32
    return %c0_i32, %c0_i32_0 : i32, i32
  }
  func.func @transform_2(%arg0: i32) -> (i32, i32) {
    %c0_i32 = arith.constant 0 : i32
    %c0_i32_0 = arith.constant 0 : i32
    %c0_i32_1 = arith.constant 0 : i32
    return %c0_i32, %c0_i32_0 : i32, i32
  }
  func.func @transform_3(%arg0: i32) -> (i32, i32) {
    %c0_i32 = arith.constant 0 : i32
    %c0_i32_0 = arith.constant 0 : i32
    %c0_i32_1 = arith.constant 0 : i32
    return %c0_i32, %c0_i32_0 : i32, i32
  }
  func.func @transform_4(%arg0: i32) -> (i32, i32) {
    %c0_i32 = arith.constant 0 : i32
    %c0_i32_0 = arith.constant 0 : i32
    %c0_i32_1 = arith.constant 0 : i32
    return %c0_i32, %c0_i32_0 : i32, i32
  }
  func.func @transform_5(%arg0: i32) -> (i32, i32) {
    %c0_i32 = arith.constant 0 : i32
    %c0_i32_0 = arith.constant 0 : i32
    return %arg0, %c0_i32 : i32, i32
  }
}

module attributes {stable_mosaic.version = 11 : i64} {
  func.func @ffwd_resident_kernel(%arg0: i32, %arg1: memref<8x32xbf16, #tpu.memory_space<vmem>>, %arg2: memref<32x128xbf16, #tpu.memory_space<vmem>>, %arg3: memref<1x128xf32, #tpu.memory_space<vmem>>, %arg4: memref<128x32xbf16, #tpu.memory_space<vmem>>, %arg5: memref<1x32xf32, #tpu.memory_space<vmem>>, %arg6: memref<8x32xf32, #tpu.memory_space<vmem>>, %arg7: memref<8x32xf32, #tpu.memory_space<vmem>>) attributes {dimension_semantics = [#tpu.dimension_semantics<parallel>], iteration_bounds = array<i64: 2>, scalar_prefetch = 0 : i64, scratch_operands = 1 : i64, tpu.core_type = #tpu.core_type<tc>, window_params = [{transform_indices = @transform_0, window_bounds = array<i64: 8, 32>}, {pipeline_mode = #tpu.pipeline_mode<synchronous>, transform_indices = @transform_1, window_bounds = array<i64: 32, 128>}, {pipeline_mode = #tpu.pipeline_mode<synchronous>, transform_indices = @transform_2, window_bounds = array<i64: 1, 128>}, {pipeline_mode = #tpu.pipeline_mode<synchronous>, transform_indices = @transform_3, window_bounds = array<i64: 128, 32>}, {pipeline_mode = #tpu.pipeline_mode<synchronous>, transform_indices = @transform_4, window_bounds = array<i64: 1, 32>}, {transform_indices = @transform_5, window_bounds = array<i64: 8, 32>}]} {
    %c0 = arith.constant 0 : index
    %c0_0 = arith.constant 0 : index
    %0 = vector.load %arg1[%c0, %c0_0] : memref<8x32xbf16, #tpu.memory_space<vmem>>, vector<8x32xbf16>
    %c0_1 = arith.constant 0 : index
    %c0_2 = arith.constant 0 : index
    %1 = vector.load %arg5[%c0_1, %c0_2] : memref<1x32xf32, #tpu.memory_space<vmem>>, vector<1x32xf32>
    %2 = vector.shape_cast %1 : vector<1x32xf32> to vector<1x32xf32>
    %3 = vector.broadcast %2 : vector<1x32xf32> to vector<8x32xf32>
    %c0_3 = arith.constant 0 : index
    %c0_4 = arith.constant 0 : index
    %4 = vector.load %arg7[%c0_3, %c0_4] : memref<8x32xf32, #tpu.memory_space<vmem>>, vector<8x32xf32>
    tpu.vector_store %arg7[%c0_3, %c0_4], %3 {strides = array<i32>} : memref<8x32xf32, #tpu.memory_space<vmem>>, vector<8x32xf32>,
    %c0_i32 = arith.constant 0 : i32
    %c128_i32 = arith.constant 128 : i32
    %5 = arith.muli %c0_i32, %c128_i32 : i32
    %6 = tpu.assume_multiple %5, 128 : i32
    %c0_5 = arith.constant 0 : index
    %7 = arith.index_cast %6 : i32 to index
    %8 = vector.load %arg2[%c0_5, %7] : memref<32x128xbf16, #tpu.memory_space<vmem>>, vector<32x128xbf16>
    %c0_6 = arith.constant 0 : index
    %9 = arith.index_cast %6 : i32 to index
    %10 = vector.load %arg3[%c0_6, %9] : memref<1x128xf32, #tpu.memory_space<vmem>>, vector<1x128xf32>
    %11 = arith.index_cast %6 : i32 to index
    %c0_7 = arith.constant 0 : index
    %12 = vector.load %arg4[%11, %c0_7] : memref<128x32xbf16, #tpu.memory_space<vmem>>, vector<128x32xbf16>
    %cst = arith.constant dense<0.000000e+00> : vector<8x128xf32>
    %13 = tpu.matmul %0, %8, %cst {dimension_numbers = #tpu.dot_dimension_numbers<[1], [0], [0], [1], [0, 0, 1, 1], [], []>} : vector<8x32xbf16>, vector<32x128xbf16>, vector<8x128xf32> -> vector<8x128xf32>
    %14 = vector.broadcast %10 : vector<1x128xf32> to vector<8x128xf32>
    %15 = arith.addf %13, %14 : vector<8x128xf32>
    %cst_8 = arith.constant 0.000000e+00 : f32
    %16 = vector.broadcast %cst_8 : f32 to vector<8x128xf32>
    %17 = arith.maximumf %15, %16 : vector<8x128xf32>
    %c0_9 = arith.constant 0 : index
    %c0_10 = arith.constant 0 : index
    %18 = vector.load %arg7[%c0_9, %c0_10] : memref<8x32xf32, #tpu.memory_space<vmem>>, vector<8x32xf32>
    %19 = arith.truncf %17 : vector<8x128xf32> to vector<8x128xbf16>
    %cst_11 = arith.constant dense<0.000000e+00> : vector<8x32xf32>
    %20 = tpu.matmul %19, %12, %cst_11 {dimension_numbers = #tpu.dot_dimension_numbers<[1], [0], [0], [1], [0, 0, 1, 1], [], []>} : vector<8x128xbf16>, vector<128x32xbf16>, vector<8x32xf32> -> vector<8x32xf32>
    %21 = arith.addf %18, %20 : vector<8x32xf32>
    %c0_12 = arith.constant 0 : index
    %c0_13 = arith.constant 0 : index
    %22 = vector.load %arg7[%c0_12, %c0_13] : memref<8x32xf32, #tpu.memory_space<vmem>>, vector<8x32xf32>
    tpu.vector_store %arg7[%c0_12, %c0_13], %21 {strides = array<i32>} : memref<8x32xf32, #tpu.memory_space<vmem>>, vector<8x32xf32>,
    %c1_i32 = arith.constant 1 : i32
    %c0_14 = arith.constant 0 : index
    %c0_15 = arith.constant 0 : index
    %23 = vector.load %arg7[%c0_14, %c0_15] : memref<8x32xf32, #tpu.memory_space<vmem>>, vector<8x32xf32>
    %c0_16 = arith.constant 0 : index
    %c0_17 = arith.constant 0 : index
    %24 = vector.load %arg6[%c0_16, %c0_17] : memref<8x32xf32, #tpu.memory_space<vmem>>, vector<8x32xf32>
    tpu.vector_store %arg6[%c0_16, %c0_17], %23 {strides = array<i32>} : memref<8x32xf32, #tpu.memory_space<vmem>>, vector<8x32xf32>,
    return
  }
  func.func @transform_0(%arg0: i32) -> (i32, i32) {
    %c0_i32 = arith.constant 0 : i32
    %c0_i32_0 = arith.constant 0 : i32
    return %arg0, %c0_i32 : i32, i32
  }
  func.func @transform_1(%arg0: i32) -> (i32, i32) {
    %c0_i32 = arith.constant 0 : i32
    %c0_i32_0 = arith.constant 0 : i32
    %c0_i32_1 = arith.constant 0 : i32
    return %c0_i32, %c0_i32_0 : i32, i32
  }
  func.func @transform_2(%arg0: i32) -> (i32, i32) {
    %c0_i32 = arith.constant 0 : i32
    %c0_i32_0 = arith.constant 0 : i32
    %c0_i32_1 = arith.constant 0 : i32
    return %c0_i32, %c0_i32_0 : i32, i32
  }
  func.func @transform_3(%arg0: i32) -> (i32, i32) {
    %c0_i32 = arith.constant 0 : i32
    %c0_i32_0 = arith.constant 0 : i32
    %c0_i32_1 = arith.constant 0 : i32
    return %c0_i32, %c0_i32_0 : i32, i32
  }
  func.func @transform_4(%arg0: i32) -> (i32, i32) {
    %c0_i32 = arith.constant 0 : i32
    %c0_i32_0 = arith.constant 0 : i32
    %c0_i32_1 = arith.constant 0 : i32
    return %c0_i32, %c0_i32_0 : i32, i32
  }
  func.func @transform_5(%arg0: i32) -> (i32, i32) {
    %c0_i32 = arith.constant 0 : i32
    %c0_i32_0 = arith.constant 0 : i32
    return %arg0, %c0_i32 : i32, i32
  }
}

</mosaic_0001>

<llo_original>
// kernel: tpu_custom_call.1
$region0: #{tpu_custom_call.1}
  #allocation0 [shape = 'u32[]', space=smem, size = 0x4, offset = 0x4, fixed_abs, tag = 'smem constant byte address 0x4 - core index']
  #allocation1 [shape = 'u32[144,128]{1,0:T(1,128)}', space=vmem, size = 0x12000, scoped, tag = 'internal scratch']
  #allocation2 [shape = 'f32[8,32]{1,0:T(8,128)}', space=vmem, size = 0x1000, scoped, tag = 'scratch operand']
  %s0 = inlined_call_operand.vmem [shape: bf16[16,32], index: 0, kind: input, shape index: {}]
  %s1 = inlined_call_operand.vmem [shape: bf16[32,128], index: 1, kind: input, shape index: {}]
  %s2 = inlined_call_operand.vmem [shape: f32[1,128], index: 2, kind: input, shape index: {}]
  %s3 = inlined_call_operand.vmem [shape: bf16[128,32], index: 3, kind: input, shape index: {}]
  %s4 = inlined_call_operand.vmem [shape: f32[1,32], index: 4, kind: input, shape index: {}]
  %s5 = inlined_call_operand.hbm [shape: f32[16,32], index: 5, kind: output, shape index: {}]
  %s6 = sld [smem:[#allocation0]]
  $region53: #{tpu_custom_call.1} parent=0
    _
  %s8 = ssub.s32 1, %s6
  %s9 = scalar_select 0, %s8, %s6
  $region1: #{tpu_custom_call.1} parent=0
    #allocation3 [shape = 'u8[8192]{0}', space=vmem, size = 0x2000, scoped, tag = 'output window, operand 0']
    #allocation4 [shape = 's32[2]{0}', space=sflag, size = 0x8, scoped, tag = 'scoped memory for tpu_custom_call.1']
    %10 = vsyncpa [#allocation4], 0
    %s11 = scalar_lea.sflag [#allocation4], 1
    %12 = vsyncpa %s11, 0
    loop: start=0, step=1, limit=4
    $region2: #{tpu_custom_call.1} parent=1 // loop_pre_header
      _
    $region3: #{tpu_custom_call.1} parent=1 // loop_header
      %s14 = sphi 0, %s18
      %p15 = scmp.ge.s32.totalorder %s14, 4
      %s24 = sphi 0, %s26
      %s27 = sphi 0, %s24
      %s28 = sphi 0, %s27
      %s44 = sphi 0, %s28
      %s48 = sphi 0, %s48
      %s50 = sphi 0, %s48
      %s51 = sphi 0, %s50
      %s65 = sphi 0, %s51
      %s69 = sphi 0, %s69
      %s71 = sphi 0, %s69
      %s72 = sphi 0, %s71
      %s86 = sphi 0, %s72
      %s90 = sphi 0, %s90
      %s92 = sphi 0, %s90
      %s93 = sphi 0, %s92
      %s107 = sphi 0, %s93
      %s111 = sphi 0, %s111
      %s113 = sphi 0, %s111
      %s114 = sphi 0, %s113
      %s128 = sphi 0, %s114
      %s134 = sphi 0, %s136
      %s137 = sphi 0, %s134
      %s138 = sphi 0, %s137
      %s154 = sphi 0, %s138
    $region4: #{tpu_custom_call.1} parent=1 // loop_header_branch
      %17 = sbr.rel (%p15) target = $region8
    $region5: #{tpu_custom_call.1} parent=1 // loop_body
      %s19 = ssub.s32 %s14, 1
      %s20 = ssub.s32 %s14, 2
      %s21 = sadd.s32 %s14, 1
      %s22 = ssub.s32 %s14, %s21
      %p23 = scmp.eq.s32.totalorder %s22, 0
      %s25 = sadd.s32 %s24, 1
      %s26 = scalar_select %p23, %s24, %s25
      %p29 = pneg %p23
      %p30 = scmp.eq.s32.totalorder %s14, 1
      %p31 = por %p29, %p30
      %p32 = scmp.ne.s32.totalorder %s24, %s27
      %p33 = scmp.eq.s32.totalorder %s14, 0
      %p34 = por %p32, %p33
      %p35 = scmp.ne.s32.totalorder %s24, %s27
      %p36 = scmp.eq.s32.totalorder %s19, 1
      %p37 = por %p35, %p36
      %p38 = scmp.ne.s32.totalorder %s27, %s28
      %p39 = scmp.eq.s32.totalorder %s19, 0
      %p40 = por %p38, %p39
      %p41 = scmp.ne.s32.totalorder %s27, %s28
      %p42 = scmp.eq.s32.totalorder %s20, 1
      %p43 = por %p41, %p42
      %p45 = scmp.ne.s32.totalorder %s28, %s44
      %p46 = scmp.eq.s32.totalorder %s20, 0
      %p47 = por %p45, %p46
      %s49 = sadd.s32 %s48, 1
      %p52 = scmp.eq.s32.totalorder %s14, 1
      %p53 = scmp.ne.s32.totalorder %s48, %s50
      %p54 = scmp.eq.s32.totalorder %s14, 0
      %p55 = por %p53, %p54
      %p56 = scmp.ne.s32.totalorder %s48, %s50
      %p57 = scmp.eq.s32.totalorder %s19, 1
      %p58 = por %p56, %p57
      %p59 = scmp.ne.s32.totalorder %s50, %s51
      %p60 = scmp.eq.s32.totalorder %s19, 0
      %p61 = por %p59, %p60
      %p62 = scmp.ne.s32.totalorder %s50, %s51
      %p63 = scmp.eq.s32.totalorder %s20, 1
      %p64 = por %p62, %p63
      %p66 = scmp.ne.s32.totalorder %s51, %s65
      %p67 = scmp.eq.s32.totalorder %s20, 0
      %p68 = por %p66, %p67
      %s70 = sadd.s32 %s69, 1
      %p73 = scmp.eq.s32.totalorder %s14, 1
      %p74 = scmp.ne.s32.totalorder %s69, %s71
      %p75 = scmp.eq.s32.totalorder %s14, 0
      %p76 = por %p74, %p75
      %p77 = scmp.ne.s32.totalorder %s69, %s71
      %p78 = scmp.eq.s32.totalorder %s19, 1
      %p79 = por %p77, %p78
      %p80 = scmp.ne.s32.totalorder %s71, %s72
      %p81 = scmp.eq.s32.totalorder %s19, 0
      %p82 = por %p80, %p81
      %p83 = scmp.ne.s32.totalorder %s71, %s72
      %p84 = scmp.eq.s32.totalorder %s20, 1
      %p85 = por %p83, %p84
      %p87 = scmp.ne.s32.totalorder %s72, %s86
      %p88 = scmp.eq.s32.totalorder %s20, 0
      %p89 = por %p87, %p88
      %s91 = sadd.s32 %s90, 1
      %p94 = scmp.eq.s32.totalorder %s14, 1
      %p95 = scmp.ne.s32.totalorder %s90, %s92
      %p96 = scmp.eq.s32.totalorder %s14, 0
      %p97 = por %p95, %p96
      %p98 = scmp.ne.s32.totalorder %s90, %s92
      %p99 = scmp.eq.s32.totalorder %s19, 1
      %p100 = por %p98, %p99
      %p101 = scmp.ne.s32.totalorder %s92, %s93
      %p102 = scmp.eq.s32.totalorder %s19, 0
      %p103 = por %p101, %p102
      %p104 = scmp.ne.s32.totalorder %s92, %s93
      %p105 = scmp.eq.s32.totalorder %s20, 1
      %p106 = por %p104, %p105
      %p108 = scmp.ne.s32.totalorder %s93, %s107
      %p109 = scmp.eq.s32.totalorder %s20, 0
      %p110 = por %p108, %p109
      %s112 = sadd.s32 %s111, 1
      %p115 = scmp.eq.s32.totalorder %s14, 1
      %p116 = scmp.ne.s32.totalorder %s111, %s113
      %p117 = scmp.eq.s32.totalorder %s14, 0
      %p118 = por %p116, %p117
      %p119 = scmp.ne.s32.totalorder %s111, %s113
      %p120 = scmp.eq.s32.totalorder %s19, 1
      %p121 = por %p119, %p120
      %p122 = scmp.ne.s32.totalorder %s113, %s114
      %p123 = scmp.eq.s32.totalorder %s19, 0
      %p124 = por %p122, %p123
      %p125 = scmp.ne.s32.totalorder %s113, %s114
      %p126 = scmp.eq.s32.totalorder %s20, 1
      %p127 = por %p125, %p126
      %p129 = scmp.ne.s32.totalorder %s114, %s128
      %p130 = scmp.eq.s32.totalorder %s20, 0
      %p131 = por %p129, %p130
      %s132 = ssub.s32 %s14, %s21
      %p133 = scmp.eq.s32.totalorder %s132, 0
      %s135 = sadd.s32 %s134, 1
      %s136 = scalar_select %p133, %s134, %s135
      %p139 = pneg %p133
      %p140 = scmp.eq.s32.totalorder %s14, 1
      %p141 = por %p139, %p140
      %p142 = scmp.ne.s32.totalorder %s134, %s137
      %p143 = scmp.eq.s32.totalorder %s14, 0
      %p144 = por %p142, %p143
      %p145 = scmp.ne.s32.totalorder %s134, %s137
      %p146 = scmp.eq.s32.totalorder %s19, 1
      %p147 = por %p145, %p146
      %p148 = scmp.ne.s32.totalorder %s137, %s138
      %p149 = scmp.eq.s32.totalorder %s19, 0
      %p150 = por %p148, %p149
      %p151 = scmp.ne.s32.totalorder %s137, %s138
      %p152 = scmp.eq.s32.totalorder %s20, 1
      %p153 = por %p151, %p152
      %p155 = scmp.ne.s32.totalorder %s138, %s154
      %p156 = scmp.eq.s32.totalorder %s20, 0
      %p157 = por %p155, %p156
      %p158 = scmp.le.s32.totalorder 1, %s14
      %p159 = scmp.lt.s32.totalorder %s14, 3
      %p160 = pnand %p158, %p159
      %p161 = pneg %p160
      // Predicated region
      $region9: #{tpu_custom_call.1} parent=5 // pred_check
        _
      $region10: #{tpu_custom_call.1} parent=5 // pred_check_branch
        %163 = sbr.rel (%p160) target = $region12
      $region11: #{tpu_custom_call.1} parent=5 // pred_region
        %s164 = ssub.s32 %s14, 1
        // Predicated region
        $region13: #{tpu_custom_call.1} parent=11 // pred_check
          %p165 = pneg %p61
        $region14: #{tpu_custom_call.1} parent=11 // pred_check_branch
          %167 = sbr.rel (%p165) target = $region16
        $region15: #{tpu_custom_call.1} parent=11 // pred_region
          _
        $region16: #{tpu_custom_call.1} parent=11 // pred_fallthru
          _
        // Predicated region
        $region17: #{tpu_custom_call.1} parent=11 // pred_check
          %p168 = pneg %p82
        $region18: #{tpu_custom_call.1} parent=11 // pred_check_branch
          %170 = sbr.rel (%p168) target = $region20
        $region19: #{tpu_custom_call.1} parent=11 // pred_region
          _
        $region20: #{tpu_custom_call.1} parent=11 // pred_fallthru
          _
        // Predicated region
        $region21: #{tpu_custom_call.1} parent=11 // pred_check
          %p171 = pneg %p103
        $region22: #{tpu_custom_call.1} parent=11 // pred_check_branch
          %173 = sbr.rel (%p171) target = $region24
        $region23: #{tpu_custom_call.1} parent=11 // pred_region
          _
        $region24: #{tpu_custom_call.1} parent=11 // pred_fallthru
          _
        // Predicated region
        $region25: #{tpu_custom_call.1} parent=11 // pred_check
          %p174 = pneg %p124
        $region26: #{tpu_custom_call.1} parent=11 // pred_check_branch
          %176 = sbr.rel (%p174) target = $region28
        $region27: #{tpu_custom_call.1} parent=11 // pred_region
          _
        $region28: #{tpu_custom_call.1} parent=11 // pred_fallthru
          _
      $region12: #{tpu_custom_call.1} parent=5 // pred_fallthru
        _
      %p177 = scmp.lt.s32.totalorder %s14, 2
      // Predicated region
      $region29: #{tpu_custom_call.1} parent=5 // pred_check
        %p178 = pneg %p177
      $region30: #{tpu_custom_call.1} parent=5 // pred_check_branch
        %180 = sbr.rel (%p178) target = $region32
      $region31: #{tpu_custom_call.1} parent=5 // pred_region
        // Predicated region
        $region33: #{tpu_custom_call.1} parent=31 // pred_check
          %p181 = pneg %p34
        $region34: #{tpu_custom_call.1} parent=31 // pred_check_branch
          %183 = sbr.rel (%p181) target = $region36
        $region35: #{tpu_custom_call.1} parent=31 // pred_region
          %p184 = scmp.lt.s32.totalorder %s14, 1
          %s185 = scalar_select %p184, %s14, 1
          %s186 = smul.addr %s185, 4
          %s187 = scalar_lea.vmem %s0, %s186
        $region36: #{tpu_custom_call.1} parent=31 // pred_fallthru
          _
      $region32: #{tpu_custom_call.1} parent=5 // pred_fallthru
        _
      %p188 = scmp.le.s32.totalorder 1, %s14
      %p189 = scmp.lt.s32.totalorder %s14, 3
      %p190 = pnand %p188, %p189
      %p191 = pneg %p190
      // Predicated region
      $region37: #{tpu_custom_call.1} parent=5 // pred_check
        _
      $region38: #{tpu_custom_call.1} parent=5 // pred_check_branch
        %193 = sbr.rel (%p190) target = $region40
      $region39: #{tpu_custom_call.1} parent=5 // pred_region
        %s194 = ssub.s32 %s14, 1
        %p195 = scmp.lt.s32.totalorder %s19, 1
        %s196 = scalar_select %p195, %s19, 1
        %s197 = smul.addr %s196, 4
        %s198 = scalar_lea.vmem %s0, %s197
        %p199 = pneg %p40
        %p200 = pneg %p37
        %p201 = pneg %p61
        %p202 = pneg %p58
        %p203 = pneg %p82
        %p204 = pneg %p79
        %p205 = pneg %p103
        %p206 = pneg %p100
        %p207 = pneg %p124
        %p208 = pneg %p121
        %p209 = pneg %p150
        %p210 = pneg %p147
        %s211 = sand.u32 %s137, 1
        %s212 = scalar_lea.sflag [#allocation4], %s211
        %s213 = sand.u32 %s137, 1
        %s214 = smul.addr %s213, 8
        %s215 = scalar_lea.vmem [#allocation3], %s214
        %p216 = scmp.lt.s32.totalorder %s19, 1
        %s217 = scalar_select %p216, %s19, 1
        %s218 = smul.addr %s217, 4
        %s219 = scalar_lea.vmem %s0, %s218
        %v221 = vld [vmem:[%s219] sm:$0xf]
        %v222 = vld [vmem:[%s4] sm:$0x1]
        %v224 = vlaneseq
        %v225 = vshrl.u32 %v224, 7
        %v226 = vsub.s32 0, %v225
        %v227 = vrot.slane %v222, %v226
        %vm229 = vcmask 261120
        %230 = vst.msk [vmem:[#allocation2] sm:$0xff] %vm229, %v227
        %v231 = vld [vmem:[%s1] sm:$0xf]
        %v232 = vld [vmem:[%s1 + $0x4] sm:$0xf]
        %v233 = vld [vmem:[%s1 + $0x8] sm:$0xf]
        %v234 = vld [vmem:[%s1 + $0xc] sm:$0xf]
        %v235 = vld [vmem:[%s2] sm:$0x1]
        %v236 = vld [vmem:[%s3] sm:$0xf]
        %v237 = vld [vmem:[%s3 + $0x4] sm:$0xf]
        %v238 = vld [vmem:[%s3 + $0x8] sm:$0xf]
        %v239 = vld [vmem:[%s3 + $0xc] sm:$0xf]
        %v240 = vld [vmem:[%s3 + $0x10] sm:$0xf]
        %v241 = vld [vmem:[%s3 + $0x14] sm:$0xf]
        %v242 = vld [vmem:[%s3 + $0x18] sm:$0xf]
        %v243 = vld [vmem:[%s3 + $0x1c] sm:$0xf]
        %v244 = vld [vmem:[%s3 + $0x20] sm:$0xf]
        %v245 = vld [vmem:[%s3 + $0x24] sm:$0xf]
        %v246 = vld [vmem:[%s3 + $0x28] sm:$0xf]
        %v247 = vld [vmem:[%s3 + $0x2c] sm:$0xf]
        %v248 = vld [vmem:[%s3 + $0x30] sm:$0xf]
        %v249 = vld [vmem:[%s3 + $0x34] sm:$0xf]
        %v250 = vld [vmem:[%s3 + $0x38] sm:$0xf]
        %v251 = vld [vmem:[%s3 + $0x3c] sm:$0xf]
        %v253 = vlaneseq
        %v254 = vshrl.u32 %v253, 7
        %v255 = vsub.s32 0, %v254
        %v256 = vrot.slane %v235, %v255
        %v262 = vunpack.c.l.b16 %v231
        %v263 = vunpack.c.l.b16 %v232
        %v264 = vunpack.c.l.b16 %v233
        %v265 = vunpack.c.l.b16 %v234
        %v266 = vpack.c.b16 %v263, %v262
        %v267 = vpack.c.b16 %v265, %v264
        %v271 = vsel %vm229, %v221, 0
        %273 = vmatprep.subr.bf16.mxu0 0
        %274 = vmatpush1.bf16.msra.mxu0 %v266
        %275 = vmatprep.subr.bf16.mxu0 0
        %276 = vmatpush1.bf16.msra.mxu0 %v267
        %277 = vmatprep.subr.bf16.mxu0 0
        %278 = vmatpush1.bf16.msra.mxu0 0
        %279 = vmatprep.subr.bf16.mxu0 0
        %280 = vmatpush1.bf16.msra.mxu0 0
        %281 = vmatprep.subr.bf16.mxu0 0
        %282 = vmatpush1.bf16.msra.mxu0 0
        %283 = vmatprep.subr.bf16.mxu0 0
        %284 = vmatpush1.bf16.msra.mxu0 0
        %285 = vmatprep.subr.bf16.mxu0 0
        %286 = vmatpush1.bf16.msra.mxu0 0
        %287 = vmatprep.subr.bf16.mxu0 0
        %288 = vmatpush1.bf16.msra.mxu0 0
        %289 = vmatprep.subr.bf16.mxu0 0
        %290 = vmatpush1.bf16.msra.mxu0 0
        %291 = vmatprep.subr.bf16.mxu0 0
        %292 = vmatpush1.bf16.msra.mxu0 0
        %293 = vmatprep.subr.bf16.mxu0 0
        %294 = vmatpush1.bf16.msra.mxu0 0
        %295 = vmatprep.subr.bf16.mxu0 0
        %296 = vmatpush1.bf16.msra.mxu0 0
        %297 = vmatprep.subr.bf16.mxu0 0
        %298 = vmatpush1.bf16.msra.mxu0 0
        %299 = vmatprep.subr.bf16.mxu0 0
        %300 = vmatpush1.bf16.msra.mxu0 0
        %301 = vmatprep.subr.bf16.mxu0 0
        %302 = vmatpush1.bf16.msra.mxu0 0
        %303 = vmatprep.subr.bf16.mxu0 0
        %304 = vmatpush1.bf16.msra.mxu0 0
        %305 = vmatprep.mubr.bf16.mxu0 0
        %306 = vmatmul.mubr.bf16.gmra.mrb[0].mxu0 %v271
        %v307 = vpop.f32.mrb[0].mxu0
        %v308 = vadd.f32 %v256, %v307
        %v309 = vpop.f32.mrb[0].mxu0
        %v310 = vpop.f32.mrb[0].mxu0
        %v311 = vpop.f32.mrb[0].mxu0
        %312 = vdwg.mxu0
        %v313 = vmax.f32 %v308, 0.0
        %v314 = vld [vmem:[#allocation2] sm:$0xff]
        %v315 = vpack.c.bf16 %v313, %v313
        %v332 = vunpack.c.l.b16 %v236
        %v333 = vunpack.c.l.b16 %v237
        %v334 = vunpack.c.l.b16 %v238
        %v335 = vunpack.c.l.b16 %v239
        %v336 = vunpack.c.l.b16 %v240
        %v337 = vunpack.c.l.b16 %v241
        %v338 = vunpack.c.l.b16 %v242
        %v339 = vunpack.c.l.b16 %v243
        %v340 = vunpack.c.l.b16 %v244
        %v341 = vunpack.c.l.b16 %v245
        %v342 = vunpack.c.l.b16 %v246
        %v343 = vunpack.c.l.b16 %v247
        %v344 = vunpack.c.l.b16 %v248
        %v345 = vunpack.c.l.b16 %v249
        %v346 = vunpack.c.l.b16 %v250
        %v347 = vunpack.c.l.b16 %v251
        %v348 = vpack.c.b16 %v333, %v332
        %v349 = vpack.c.b16 %v335, %v334
        %v350 = vpack.c.b16 %v337, %v336
        %v351 = vpack.c.b16 %v339, %v338
        %v352 = vpack.c.b16 %v341, %v340
        %v353 = vpack.c.b16 %v343, %v342
        %v354 = vpack.c.b16 %v345, %v344
        %v355 = vpack.c.b16 %v347, %v346
        %364 = vmatprep.subr.bf16.mxu0 0
        %365 = vmatpush1.bf16.msra.mxu0 %v348
        %366 = vmatprep.subr.bf16.mxu0 0
        %367 = vmatpush1.bf16.msra.mxu0 %v349
        %368 = vmatprep.subr.bf16.mxu0 0
        %369 = vmatpush1.bf16.msra.mxu0 %v350
        %370 = vmatprep.subr.bf16.mxu0 0
        %371 = vmatpush1.bf16.msra.mxu0 %v351
        %372 = vmatprep.subr.bf16.mxu0 0
        %373 = vmatpush1.bf16.msra.mxu0 %v352
        %374 = vmatprep.subr.bf16.mxu0 0
        %375 = vmatpush1.bf16.msra.mxu0 %v353
        %376 = vmatprep.subr.bf16.mxu0 0
        %377 = vmatpush1.bf16.msra.mxu0 %v354
        %378 = vmatprep.subr.bf16.mxu0 0
        %379 = vmatpush1.bf16.msra.mxu0 %v355
        %380 = vmatprep.subr.bf16.mxu0 0
        %381 = vmatpush1.bf16.msra.mxu0 0
        %382 = vmatprep.subr.bf16.mxu0 0
        %383 = vmatpush1.bf16.msra.mxu0 0
        %384 = vmatprep.subr.bf16.mxu0 0
        %385 = vmatpush1.bf16.msra.mxu0 0
        %386 = vmatprep.subr.bf16.mxu0 0
        %387 = vmatpush1.bf16.msra.mxu0 0
        %388 = vmatprep.subr.bf16.mxu0 0
        %389 = vmatpush1.bf16.msra.mxu0 0
        %390 = vmatprep.subr.bf16.mxu0 0
        %391 = vmatpush1.bf16.msra.mxu0 0
        %392 = vmatprep.subr.bf16.mxu0 0
        %393 = vmatpush1.bf16.msra.mxu0 0
        %394 = vmatprep.subr.bf16.mxu0 0
        %395 = vmatpush1.bf16.msra.mxu0 0
        %396 = vmatprep.mubr.bf16.mxu0 0
        %397 = vmatmul.mubr.bf16.gmra.mrb[0].mxu0 %v315
        %v398 = vpop.f32.mrb[0].mxu0
        %v399 = vadd.f32 0.0, %v398
        %v400 = vpop.f32.mrb[0].mxu0
        %v401 = vpop.f32.mrb[0].mxu0
        %v402 = vpop.f32.mrb[0].mxu0
        %403 = vdwg.mxu0
        %v404 = vadd.f32 %v314, %v399
        %405 = vst.msk [vmem:[#allocation2] sm:$0xff] %vm229, %v404
        %v406 = vld [vmem:[#allocation2] sm:$0xff]
        %407 = vst.msk [vmem:[%s215] sm:$0xff] %vm229, %v406
        %s408 = sand.u32 %s137, 1
        %s409 = scalar_lea.sflag [#allocation4], %s408
        %s410 = sand.u32 %s137, 1
        %s411 = smul.addr %s410, 8
        %s412 = scalar_lea.vmem [#allocation3], %s411
        // Predicated region
        $region41: #{tpu_custom_call.1} parent=39 // pred_check
          %p413 = pneg %p147
        $region42: #{tpu_custom_call.1} parent=39 // pred_check_branch
          %415 = sbr.rel (%p413) target = $region44
        $region43: #{tpu_custom_call.1} parent=39 // pred_region
          %s417 = ssub.s32 128, 128
          %418 = vsyncadd %s409, %s417
          %s419 = smul.addr %s19, 128
          %s420 = scalar_lea.hbm %s5, %s419
          %s422 = sshll.u32 %s412, 4
          %s423 = int_to_ptr.vmem [resolvable:$true] %s422
          %425 = dma.vmem_to_hbm [thread:$0]  %s423, 128, %s420, %s409
        $region44: #{tpu_custom_call.1} parent=39 // pred_fallthru
          _
      $region40: #{tpu_custom_call.1} parent=5 // pred_fallthru
        _
      %p426 = scmp.le.s32.totalorder 2, %s14
      // Predicated region
      $region45: #{tpu_custom_call.1} parent=5 // pred_check
        %p427 = pneg %p426
      $region46: #{tpu_custom_call.1} parent=5 // pred_check_branch
        %429 = sbr.rel (%p427) target = $region48
      $region47: #{tpu_custom_call.1} parent=5 // pred_region
        %s430 = ssub.s32 %s14, 2
        // Predicated region
        $region49: #{tpu_custom_call.1} parent=47 // pred_check
          %p431 = pneg %p153
        $region50: #{tpu_custom_call.1} parent=47 // pred_check_branch
          %433 = sbr.rel (%p431) target = $region52
        $region51: #{tpu_custom_call.1} parent=47 // pred_region
          %s434 = sand.u32 %s138, 1
          %s435 = scalar_lea.sflag [#allocation4], %s434
          %s436 = sand.u32 %s138, 1
          %s437 = smul.addr %s436, 8
          %s438 = scalar_lea.vmem [#allocation3], %s437
          %439 = dma.done %s435, 128
        $region52: #{tpu_custom_call.1} parent=47 // pred_fallthru
          _
      $region48: #{tpu_custom_call.1} parent=5 // pred_fallthru
        _
    $region6: #{tpu_custom_call.1} parent=1 // loop_footer
      %s18 = sadd.s32 1, %s14
    $region7: #{tpu_custom_call.1} parent=1 // loop_footer_branch
      %13 = sbr.rel target = $region3
    $region8: #{tpu_custom_call.1} parent=1 // loop_exit
      _
    %440 = vsyncpa [#allocation4], 1
    %s441 = scalar_lea.sflag [#allocation4], 1
    %442 = vsyncpa %s441, 1

// kernel: tpu_custom_call.1
$region0: #{tpu_custom_call.1}
  #allocation0 [shape = 'u32[]', space=smem, size = 0x4, offset = 0x4, fixed_abs, tag = 'smem constant byte address 0x4 - core index']
  #allocation1 [shape = 'u32[144,128]{1,0:T(1,128)}', space=vmem, size = 0x12000, scoped, tag = 'internal scratch']
  #allocation2 [shape = 'f32[8,32]{1,0:T(8,128)}', space=vmem, size = 0x1000, scoped, tag = 'scratch operand']
  %s0 = inlined_call_operand.vmem [shape: bf16[16,32], index: 0, kind: input, shape index: {}]
  %s1 = inlined_call_operand.vmem [shape: bf16[32,128], index: 1, kind: input, shape index: {}]
  %s2 = inlined_call_operand.vmem [shape: f32[1,128], index: 2, kind: input, shape index: {}]
  %s3 = inlined_call_operand.vmem [shape: bf16[128,32], index: 3, kind: input, shape index: {}]
  %s4 = inlined_call_operand.vmem [shape: f32[1,32], index: 4, kind: input, shape index: {}]
  %s5 = inlined_call_operand.hbm [shape: f32[16,32], index: 5, kind: output, shape index: {}]
  %s6 = sld [smem:[#allocation0]]
  $region53: #{tpu_custom_call.1} parent=0
    _
  %s8 = ssub.s32 1, %s6
  %s9 = scalar_select 0, %s8, %s6
  $region1: #{tpu_custom_call.1} parent=0
    #allocation3 [shape = 'u8[8192]{0}', space=vmem, size = 0x2000, scoped, tag = 'output window, operand 0']
    #allocation4 [shape = 's32[2]{0}', space=sflag, size = 0x8, scoped, tag = 'scoped memory for tpu_custom_call.1']
    %10 = vsyncpa [#allocation4], 0
    %s11 = scalar_lea.sflag [#allocation4], 1
    %12 = vsyncpa %s11, 0
    loop: start=0, step=1, limit=4
    $region2: #{tpu_custom_call.1} parent=1 // loop_pre_header
      _
    $region3: #{tpu_custom_call.1} parent=1 // loop_header
      %s14 = sphi 0, %s18
      %p15 = scmp.ge.s32.totalorder %s14, 4
      %s24 = sphi 0, %s26
      %s27 = sphi 0, %s24
      %s28 = sphi 0, %s27
      %s44 = sphi 0, %s28
      %s48 = sphi 0, %s48
      %s50 = sphi 0, %s48
      %s51 = sphi 0, %s50
      %s65 = sphi 0, %s51
      %s69 = sphi 0, %s69
      %s71 = sphi 0, %s69
      %s72 = sphi 0, %s71
      %s86 = sphi 0, %s72
      %s90 = sphi 0, %s90
      %s92 = sphi 0, %s90
      %s93 = sphi 0, %s92
      %s107 = sphi 0, %s93
      %s111 = sphi 0, %s111
      %s113 = sphi 0, %s111
      %s114 = sphi 0, %s113
      %s128 = sphi 0, %s114
      %s134 = sphi 0, %s136
      %s137 = sphi 0, %s134
      %s138 = sphi 0, %s137
      %s154 = sphi 0, %s138
    $region4: #{tpu_custom_call.1} parent=1 // loop_header_branch
      %17 = sbr.rel (%p15) target = $region8
    $region5: #{tpu_custom_call.1} parent=1 // loop_body
      %s19 = ssub.s32 %s14, 1
      %s20 = ssub.s32 %s14, 2
      %s21 = sadd.s32 %s14, 1
      %s22 = ssub.s32 %s14, %s21
      %p23 = scmp.eq.s32.totalorder %s22, 0
      %s25 = sadd.s32 %s24, 1
      %s26 = scalar_select %p23, %s24, %s25
      %p29 = pneg %p23
      %p30 = scmp.eq.s32.totalorder %s14, 1
      %p31 = por %p29, %p30
      %p32 = scmp.ne.s32.totalorder %s24, %s27
      %p33 = scmp.eq.s32.totalorder %s14, 0
      %p34 = por %p32, %p33
      %p35 = scmp.ne.s32.totalorder %s24, %s27
      %p36 = scmp.eq.s32.totalorder %s19, 1
      %p37 = por %p35, %p36
      %p38 = scmp.ne.s32.totalorder %s27, %s28
      %p39 = scmp.eq.s32.totalorder %s19, 0
      %p40 = por %p38, %p39
      %p41 = scmp.ne.s32.totalorder %s27, %s28
      %p42 = scmp.eq.s32.totalorder %s20, 1
      %p43 = por %p41, %p42
      %p45 = scmp.ne.s32.totalorder %s28, %s44
      %p46 = scmp.eq.s32.totalorder %s20, 0
      %p47 = por %p45, %p46
      %s49 = sadd.s32 %s48, 1
      %p52 = scmp.eq.s32.totalorder %s14, 1
      %p53 = scmp.ne.s32.totalorder %s48, %s50
      %p54 = scmp.eq.s32.totalorder %s14, 0
      %p55 = por %p53, %p54
      %p56 = scmp.ne.s32.totalorder %s48, %s50
      %p57 = scmp.eq.s32.totalorder %s19, 1
      %p58 = por %p56, %p57
      %p59 = scmp.ne.s32.totalorder %s50, %s51
      %p60 = scmp.eq.s32.totalorder %s19, 0
      %p61 = por %p59, %p60
      %p62 = scmp.ne.s32.totalorder %s50, %s51
      %p63 = scmp.eq.s32.totalorder %s20, 1
      %p64 = por %p62, %p63
      %p66 = scmp.ne.s32.totalorder %s51, %s65
      %p67 = scmp.eq.s32.totalorder %s20, 0
      %p68 = por %p66, %p67
      %s70 = sadd.s32 %s69, 1
      %p73 = scmp.eq.s32.totalorder %s14, 1
      %p74 = scmp.ne.s32.totalorder %s69, %s71
      %p75 = scmp.eq.s32.totalorder %s14, 0
      %p76 = por %p74, %p75
      %p77 = scmp.ne.s32.totalorder %s69, %s71
      %p78 = scmp.eq.s32.totalorder %s19, 1
      %p79 = por %p77, %p78
      %p80 = scmp.ne.s32.totalorder %s71, %s72
      %p81 = scmp.eq.s32.totalorder %s19, 0
      %p82 = por %p80, %p81
      %p83 = scmp.ne.s32.totalorder %s71, %s72
      %p84 = scmp.eq.s32.totalorder %s20, 1
      %p85 = por %p83, %p84
      %p87 = scmp.ne.s32.totalorder %s72, %s86
      %p88 = scmp.eq.s32.totalorder %s20, 0
      %p89 = por %p87, %p88
      %s91 = sadd.s32 %s90, 1
      %p94 = scmp.eq.s32.totalorder %s14, 1
      %p95 = scmp.ne.s32.totalorder %s90, %s92
      %p96 = scmp.eq.s32.totalorder %s14, 0
      %p97 = por %p95, %p96
      %p98 = scmp.ne.s32.totalorder %s90, %s92
      %p99 = scmp.eq.s32.totalorder %s19, 1
      %p100 = por %p98, %p99
      %p101 = scmp.ne.s32.totalorder %s92, %s93
      %p102 = scmp.eq.s32.totalorder %s19, 0
      %p103 = por %p101, %p102
      %p104 = scmp.ne.s32.totalorder %s92, %s93
      %p105 = scmp.eq.s32.totalorder %s20, 1
      %p106 = por %p104, %p105
      %p108 = scmp.ne.s32.totalorder %s93, %s107
      %p109 = scmp.eq.s32.totalorder %s20, 0
      %p110 = por %p108, %p109
      %s112 = sadd.s32 %s111, 1
      %p115 = scmp.eq.s32.totalorder %s14, 1
      %p116 = scmp.ne.s32.totalorder %s111, %s113
      %p117 = scmp.eq.s32.totalorder %s14, 0
      %p118 = por %p116, %p117
      %p119 = scmp.ne.s32.totalorder %s111, %s113
      %p120 = scmp.eq.s32.totalorder %s19, 1
      %p121 = por %p119, %p120
      %p122 = scmp.ne.s32.totalorder %s113, %s114
      %p123 = scmp.eq.s32.totalorder %s19, 0
      %p124 = por %p122, %p123
      %p125 = scmp.ne.s32.totalorder %s113, %s114
      %p126 = scmp.eq.s32.totalorder %s20, 1
      %p127 = por %p125, %p126
      %p129 = scmp.ne.s32.totalorder %s114, %s128
      %p130 = scmp.eq.s32.totalorder %s20, 0
      %p131 = por %p129, %p130
      %s132 = ssub.s32 %s14, %s21
      %p133 = scmp.eq.s32.totalorder %s132, 0
      %s135 = sadd.s32 %s134, 1
      %s136 = scalar_select %p133, %s134, %s135
      %p139 = pneg %p133
      %p140 = scmp.eq.s32.totalorder %s14, 1
      %p141 = por %p139, %p140
      %p142 = scmp.ne.s32.totalorder %s134, %s137
      %p143 = scmp.eq.s32.totalorder %s14, 0
      %p144 = por %p142, %p143
      %p145 = scmp.ne.s32.totalorder %s134, %s137
      %p146 = scmp.eq.s32.totalorder %s19, 1
      %p147 = por %p145, %p146
      %p148 = scmp.ne.s32.totalorder %s137, %s138
      %p149 = scmp.eq.s32.totalorder %s19, 0
      %p150 = por %p148, %p149
      %p151 = scmp.ne.s32.totalorder %s137, %s138
      %p152 = scmp.eq.s32.totalorder %s20, 1
      %p153 = por %p151, %p152
      %p155 = scmp.ne.s32.totalorder %s138, %s154
      %p156 = scmp.eq.s32.totalorder %s20, 0
      %p157 = por %p155, %p156
      %p158 = scmp.le.s32.totalorder 1, %s14
      %p159 = scmp.lt.s32.totalorder %s14, 3
      %p160 = pnand %p158, %p159
      %p161 = pneg %p160
      // Predicated region
      $region9: #{tpu_custom_call.1} parent=5 // pred_check
        _
      $region10: #{tpu_custom_call.1} parent=5 // pred_check_branch
        %163 = sbr.rel (%p160) target = $region12
      $region11: #{tpu_custom_call.1} parent=5 // pred_region
        %s164 = ssub.s32 %s14, 1
        // Predicated region
        $region13: #{tpu_custom_call.1} parent=11 // pred_check
          %p165 = pneg %p61
        $region14: #{tpu_custom_call.1} parent=11 // pred_check_branch
          %167 = sbr.rel (%p165) target = $region16
        $region15: #{tpu_custom_call.1} parent=11 // pred_region
          _
        $region16: #{tpu_custom_call.1} parent=11 // pred_fallthru
          _
        // Predicated region
        $region17: #{tpu_custom_call.1} parent=11 // pred_check
          %p168 = pneg %p82
        $region18: #{tpu_custom_call.1} parent=11 // pred_check_branch
          %170 = sbr.rel (%p168) target = $region20
        $region19: #{tpu_custom_call.1} parent=11 // pred_region
          _
        $region20: #{tpu_custom_call.1} parent=11 // pred_fallthru
          _
        // Predicated region
        $region21: #{tpu_custom_call.1} parent=11 // pred_check
          %p171 = pneg %p103
        $region22: #{tpu_custom_call.1} parent=11 // pred_check_branch
          %173 = sbr.rel (%p171) target = $region24
        $region23: #{tpu_custom_call.1} parent=11 // pred_region
          _
        $region24: #{tpu_custom_call.1} parent=11 // pred_fallthru
          _
        // Predicated region
        $region25: #{tpu_custom_call.1} parent=11 // pred_check
          %p174 = pneg %p124
        $region26: #{tpu_custom_call.1} parent=11 // pred_check_branch
          %176 = sbr.rel (%p174) target = $region28
        $region27: #{tpu_custom_call.1} parent=11 // pred_region
          _
        $region28: #{tpu_custom_call.1} parent=11 // pred_fallthru
          _
      $region12: #{tpu_custom_call.1} parent=5 // pred_fallthru
        _
      %p177 = scmp.lt.s32.totalorder %s14, 2
      // Predicated region
      $region29: #{tpu_custom_call.1} parent=5 // pred_check
        %p178 = pneg %p177
      $region30: #{tpu_custom_call.1} parent=5 // pred_check_branch
        %180 = sbr.rel (%p178) target = $region32
      $region31: #{tpu_custom_call.1} parent=5 // pred_region
        // Predicated region
        $region33: #{tpu_custom_call.1} parent=31 // pred_check
          %p181 = pneg %p34
        $region34: #{tpu_custom_call.1} parent=31 // pred_check_branch
          %183 = sbr.rel (%p181) target = $region36
        $region35: #{tpu_custom_call.1} parent=31 // pred_region
          %p184 = scmp.lt.s32.totalorder %s14, 1
          %s185 = scalar_select %p184, %s14, 1
          %s186 = smul.addr %s185, 4
          %s187 = scalar_lea.vmem %s0, %s186
        $region36: #{tpu_custom_call.1} parent=31 // pred_fallthru
          _
      $region32: #{tpu_custom_call.1} parent=5 // pred_fallthru
        _
      %p188 = scmp.le.s32.totalorder 1, %s14
      %p189 = scmp.lt.s32.totalorder %s14, 3
      %p190 = pnand %p188, %p189
      %p191 = pneg %p190
      // Predicated region
      $region37: #{tpu_custom_call.1} parent=5 // pred_check
        _
      $region38: #{tpu_custom_call.1} parent=5 // pred_check_branch
        %193 = sbr.rel (%p190) target = $region40
      $region39: #{tpu_custom_call.1} parent=5 // pred_region
        %s194 = ssub.s32 %s14, 1
        %p195 = scmp.lt.s32.totalorder %s19, 1
        %s196 = scalar_select %p195, %s19, 1
        %s197 = smul.addr %s196, 4
        %s198 = scalar_lea.vmem %s0, %s197
        %p199 = pneg %p40
        %p200 = pneg %p37
        %p201 = pneg %p61
        %p202 = pneg %p58
        %p203 = pneg %p82
        %p204 = pneg %p79
        %p205 = pneg %p103
        %p206 = pneg %p100
        %p207 = pneg %p124
        %p208 = pneg %p121
        %p209 = pneg %p150
        %p210 = pneg %p147
        %s211 = sand.u32 %s137, 1
        %s212 = scalar_lea.sflag [#allocation4], %s211
        %s213 = sand.u32 %s137, 1
        %s214 = smul.addr %s213, 8
        %s215 = scalar_lea.vmem [#allocation3], %s214
        %p216 = scmp.lt.s32.totalorder %s19, 1
        %s217 = scalar_select %p216, %s19, 1
        %s218 = smul.addr %s217, 4
        %s219 = scalar_lea.vmem %s0, %s218
        %v221 = vld [vmem:[%s219] sm:$0xf]
        %v222 = vld [vmem:[%s4] sm:$0x1]
        %v224 = vlaneseq
        %v225 = vshrl.u32 %v224, 7
        %v226 = vsub.s32 0, %v225
        %v227 = vrot.slane %v222, %v226
        %vm229 = vcmask 261120
        %230 = vst.msk [vmem:[#allocation2] sm:$0xff] %vm229, %v227
        %v231 = vld [vmem:[%s1] sm:$0xf]
        %v232 = vld [vmem:[%s1 + $0x4] sm:$0xf]
        %v233 = vld [vmem:[%s1 + $0x8] sm:$0xf]
        %v234 = vld [vmem:[%s1 + $0xc] sm:$0xf]
        %v235 = vld [vmem:[%s2] sm:$0x1]
        %v236 = vld [vmem:[%s3] sm:$0xf]
        %v237 = vld [vmem:[%s3 + $0x4] sm:$0xf]
        %v238 = vld [vmem:[%s3 + $0x8] sm:$0xf]
        %v239 = vld [vmem:[%s3 + $0xc] sm:$0xf]
        %v240 = vld [vmem:[%s3 + $0x10] sm:$0xf]
        %v241 = vld [vmem:[%s3 + $0x14] sm:$0xf]
        %v242 = vld [vmem:[%s3 + $0x18] sm:$0xf]
        %v243 = vld [vmem:[%s3 + $0x1c] sm:$0xf]
        %v244 = vld [vmem:[%s3 + $0x20] sm:$0xf]
        %v245 = vld [vmem:[%s3 + $0x24] sm:$0xf]
        %v246 = vld [vmem:[%s3 + $0x28] sm:$0xf]
        %v247 = vld [vmem:[%s3 + $0x2c] sm:$0xf]
        %v248 = vld [vmem:[%s3 + $0x30] sm:$0xf]
        %v249 = vld [vmem:[%s3 + $0x34] sm:$0xf]
        %v250 = vld [vmem:[%s3 + $0x38] sm:$0xf]
        %v251 = vld [vmem:[%s3 + $0x3c] sm:$0xf]
        %v253 = vlaneseq
        %v254 = vshrl.u32 %v253, 7
        %v255 = vsub.s32 0, %v254
        %v256 = vrot.slane %v235, %v255
        %v262 = vunpack.c.l.b16 %v231
        %v263 = vunpack.c.l.b16 %v232
        %v264 = vunpack.c.l.b16 %v233
        %v265 = vunpack.c.l.b16 %v234
        %v266 = vpack.c.b16 %v263, %v262
        %v267 = vpack.c.b16 %v265, %v264
        %v271 = vsel %vm229, %v221, 0
        %273 = vmatprep.subr.bf16.mxu0 0
        %274 = vmatpush1.bf16.msra.mxu0 %v266
        %275 = vmatprep.subr.bf16.mxu0 0
        %276 = vmatpush1.bf16.msra.mxu0 %v267
        %277 = vmatprep.subr.bf16.mxu0 0
        %278 = vmatpush1.bf16.msra.mxu0 0
        %279 = vmatprep.subr.bf16.mxu0 0
        %280 = vmatpush1.bf16.msra.mxu0 0
        %281 = vmatprep.subr.bf16.mxu0 0
        %282 = vmatpush1.bf16.msra.mxu0 0
        %283 = vmatprep.subr.bf16.mxu0 0
        %284 = vmatpush1.bf16.msra.mxu0 0
        %285 = vmatprep.subr.bf16.mxu0 0
        %286 = vmatpush1.bf16.msra.mxu0 0
        %287 = vmatprep.subr.bf16.mxu0 0
        %288 = vmatpush1.bf16.msra.mxu0 0
        %289 = vmatprep.subr.bf16.mxu0 0
        %290 = vmatpush1.bf16.msra.mxu0 0
        %291 = vmatprep.subr.bf16.mxu0 0
        %292 = vmatpush1.bf16.msra.mxu0 0
        %293 = vmatprep.subr.bf16.mxu0 0
        %294 = vmatpush1.bf16.msra.mxu0 0
        %295 = vmatprep.subr.bf16.mxu0 0
        %296 = vmatpush1.bf16.msra.mxu0 0
        %297 = vmatprep.subr.bf16.mxu0 0
        %298 = vmatpush1.bf16.msra.mxu0 0
        %299 = vmatprep.subr.bf16.mxu0 0
        %300 = vmatpush1.bf16.msra.mxu0 0
        %301 = vmatprep.subr.bf16.mxu0 0
        %302 = vmatpush1.bf16.msra.mxu0 0
        %303 = vmatprep.subr.bf16.mxu0 0
        %304 = vmatpush1.bf16.msra.mxu0 0
        %305 = vmatprep.mubr.bf16.mxu0 0
        %306 = vmatmul.mubr.bf16.gmra.mrb[0].mxu0 %v271
        %v307 = vpop.f32.mrb[0].mxu0
        %v308 = vadd.f32 %v256, %v307
        %v309 = vpop.f32.mrb[0].mxu0
        %v310 = vpop.f32.mrb[0].mxu0
        %v311 = vpop.f32.mrb[0].mxu0
        %312 = vdwg.mxu0
        %v313 = vmax.f32 %v308, 0.0
        %v314 = vld [vmem:[#allocation2] sm:$0xff]
        %v315 = vpack.c.bf16 %v313, %v313
        %v332 = vunpack.c.l.b16 %v236
        %v333 = vunpack.c.l.b16 %v237
        %v334 = vunpack.c.l.b16 %v238
        %v335 = vunpack.c.l.b16 %v239
        %v336 = vunpack.c.l.b16 %v240
        %v337 = vunpack.c.l.b16 %v241
        %v338 = vunpack.c.l.b16 %v242
        %v339 = vunpack.c.l.b16 %v243
        %v340 = vunpack.c.l.b16 %v244
        %v341 = vunpack.c.l.b16 %v245
        %v342 = vunpack.c.l.b16 %v246
        %v343 = vunpack.c.l.b16 %v247
        %v344 = vunpack.c.l.b16 %v248
        %v345 = vunpack.c.l.b16 %v249
        %v346 = vunpack.c.l.b16 %v250
        %v347 = vunpack.c.l.b16 %v251
        %v348 = vpack.c.b16 %v333, %v332
        %v349 = vpack.c.b16 %v335, %v334
        %v350 = vpack.c.b16 %v337, %v336
        %v351 = vpack.c.b16 %v339, %v338
        %v352 = vpack.c.b16 %v341, %v340
        %v353 = vpack.c.b16 %v343, %v342
        %v354 = vpack.c.b16 %v345, %v344
        %v355 = vpack.c.b16 %v347, %v346
        %364 = vmatprep.subr.bf16.mxu0 0
        %365 = vmatpush1.bf16.msra.mxu0 %v348
        %366 = vmatprep.subr.bf16.mxu0 0
        %367 = vmatpush1.bf16.msra.mxu0 %v349
        %368 = vmatprep.subr.bf16.mxu0 0
        %369 = vmatpush1.bf16.msra.mxu0 %v350
        %370 = vmatprep.subr.bf16.mxu0 0
        %371 = vmatpush1.bf16.msra.mxu0 %v351
        %372 = vmatprep.subr.bf16.mxu0 0
        %373 = vmatpush1.bf16.msra.mxu0 %v352
        %374 = vmatprep.subr.bf16.mxu0 0
        %375 = vmatpush1.bf16.msra.mxu0 %v353
        %376 = vmatprep.subr.bf16.mxu0 0
        %377 = vmatpush1.bf16.msra.mxu0 %v354
        %378 = vmatprep.subr.bf16.mxu0 0
        %379 = vmatpush1.bf16.msra.mxu0 %v355
        %380 = vmatprep.subr.bf16.mxu0 0
        %381 = vmatpush1.bf16.msra.mxu0 0
        %382 = vmatprep.subr.bf16.mxu0 0
        %383 = vmatpush1.bf16.msra.mxu0 0
        %384 = vmatprep.subr.bf16.mxu0 0
        %385 = vmatpush1.bf16.msra.mxu0 0
        %386 = vmatprep.subr.bf16.mxu0 0
        %387 = vmatpush1.bf16.msra.mxu0 0
        %388 = vmatprep.subr.bf16.mxu0 0
        %389 = vmatpush1.bf16.msra.mxu0 0
        %390 = vmatprep.subr.bf16.mxu0 0
        %391 = vmatpush1.bf16.msra.mxu0 0
        %392 = vmatprep.subr.bf16.mxu0 0
        %393 = vmatpush1.bf16.msra.mxu0 0
        %394 = vmatprep.subr.bf16.mxu0 0
        %395 = vmatpush1.bf16.msra.mxu0 0
        %396 = vmatprep.mubr.bf16.mxu0 0
        %397 = vmatmul.mubr.bf16.gmra.mrb[0].mxu0 %v315
        %v398 = vpop.f32.mrb[0].mxu0
        %v399 = vadd.f32 0.0, %v398
        %v400 = vpop.f32.mrb[0].mxu0
        %v401 = vpop.f32.mrb[0].mxu0
        %v402 = vpop.f32.mrb[0].mxu0
        %403 = vdwg.mxu0
        %v404 = vadd.f32 %v314, %v399
        %405 = vst.msk [vmem:[#allocation2] sm:$0xff] %vm229, %v404
        %v406 = vld [vmem:[#allocation2] sm:$0xff]
        %407 = vst.msk [vmem:[%s215] sm:$0xff] %vm229, %v406
        %s408 = sand.u32 %s137, 1
        %s409 = scalar_lea.sflag [#allocation4], %s408
        %s410 = sand.u32 %s137, 1
        %s411 = smul.addr %s410, 8
        %s412 = scalar_lea.vmem [#allocation3], %s411
        // Predicated region
        $region41: #{tpu_custom_call.1} parent=39 // pred_check
          %p413 = pneg %p147
        $region42: #{tpu_custom_call.1} parent=39 // pred_check_branch
          %415 = sbr.rel (%p413) target = $region44
        $region43: #{tpu_custom_call.1} parent=39 // pred_region
          %s417 = ssub.s32 128, 128
          %418 = vsyncadd %s409, %s417
          %s419 = smul.addr %s19, 128
          %s420 = scalar_lea.hbm %s5, %s419
          %s422 = sshll.u32 %s412, 4
          %s423 = int_to_ptr.vmem [resolvable:$true] %s422
          %425 = dma.vmem_to_hbm [thread:$0]  %s423, 128, %s420, %s409
        $region44: #{tpu_custom_call.1} parent=39 // pred_fallthru
          _
      $region40: #{tpu_custom_call.1} parent=5 // pred_fallthru
        _
      %p426 = scmp.le.s32.totalorder 2, %s14
      // Predicated region
      $region45: #{tpu_custom_call.1} parent=5 // pred_check
        %p427 = pneg %p426
      $region46: #{tpu_custom_call.1} parent=5 // pred_check_branch
        %429 = sbr.rel (%p427) target = $region48
      $region47: #{tpu_custom_call.1} parent=5 // pred_region
        %s430 = ssub.s32 %s14, 2
        // Predicated region
        $region49: #{tpu_custom_call.1} parent=47 // pred_check
          %p431 = pneg %p153
        $region50: #{tpu_custom_call.1} parent=47 // pred_check_branch
          %433 = sbr.rel (%p431) target = $region52
        $region51: #{tpu_custom_call.1} parent=47 // pred_region
          %s434 = sand.u32 %s138, 1
          %s435 = scalar_lea.sflag [#allocation4], %s434
          %s436 = sand.u32 %s138, 1
          %s437 = smul.addr %s436, 8
          %s438 = scalar_lea.vmem [#allocation3], %s437
          %439 = dma.done %s435, 128
        $region52: #{tpu_custom_call.1} parent=47 // pred_fallthru
          _
      $region48: #{tpu_custom_call.1} parent=5 // pred_fallthru
        _
    $region6: #{tpu_custom_call.1} parent=1 // loop_footer
      %s18 = sadd.s32 1, %s14
    $region7: #{tpu_custom_call.1} parent=1 // loop_footer_branch
      %13 = sbr.rel target = $region3
    $region8: #{tpu_custom_call.1} parent=1 // loop_exit
      _
    %440 = vsyncpa [#allocation4], 1
    %s441 = scalar_lea.sflag [#allocation4], 1
    %442 = vsyncpa %s441, 1

</llo_original>
